<compile_context>
chip_gen: v6e
topology: v6e:2x2x1
jax: 0.10.0
libtpu: 0.0.40
codegen_flags: <defaults>
</compile_context>

<pallas_src>
import functools
import math

import jax
import jax.numpy as jnp
from jax import lax
from jax.experimental import pallas as pl
from jax.experimental.pallas import tpu as pltpu

BN_EPS = 1e-5          # PyTorch BatchNorm1d default
NET_CHANNELS = 32      # `channels` argument of InitProject


# ----------------------------- fused Pallas kernel ---------------------------
def _init_project_kernel(x_ref, pack_ref, o_ref, *, eps, channels, cpad):
    """Conv1d(2->32)+BN+ReLU -> Conv1d(32->64)+BN+ReLU -> Conv1d(64->C), fused.

    x_ref    : (2, M) f32, M = B*L (channels on sublanes, positions lane-dense)
    pack_ref : (64 + cpad + 32, 72) f32 packed parameters:
               [0:64,          0:32]  w2  (64, 32)
               [64:64+C,       0:64]  w3  (C, 64)
               [64+cpad:+32,   0:2 ]  w1  (32, 2)
               [0:32, 64] g1   [0:32, 65] be1
               [0:64, 66] g2   [0:64, 67] be2   [0:C, 68] b3
    o_ref    : (C, M)
    """
    x = x_ref[...].astype(jnp.float32)                       # (2, M)
    m = x.shape[1]
    inv_m = 1.0 / float(m)

    def bn_relu(h, g, be):
        # One-pass statistics: both reductions issue together (no serialized
        # mean -> subtract -> square -> mean chain).  E[x^2]-E[x]^2 cancellation
        # is negligible at O(1) post-conv activations and is guarded by eps.
        s = jnp.sum(h, axis=1, keepdims=True) * inv_m         # E[x]   (C, 1)
        sq = jnp.sum(h * h, axis=1, keepdims=True) * inv_m    # E[x^2] (C, 1)
        var = sq - s * s
        a = g * lax.rsqrt(var + eps)                          # fused scale
        b = be - s * a                                        # fused shift
        return jnp.maximum(h * a + b, 0.0)

    # --- layer 1: Conv1d(2 -> 32) as two VPU broadcast-FMAs (K=2: skip the MXU) ---
    w1 = pack_ref[64 + cpad:64 + cpad + 32, 0:2]              # (32, 2)
    h = w1[:, 0:1] * x[0:1, :] + w1[:, 1:2] * x[1:2, :]       # (32, M)
    h = bn_relu(h, pack_ref[0:32, 64:65], pack_ref[0:32, 65:66])

    # --- layer 2: Conv1d(32 -> 64) on the MXU ---
    w2 = pack_ref[0:64, 0:32]                                 # (64, 32)
    h = jnp.dot(w2, h, preferred_element_type=jnp.float32)    # (64, M)
    h = bn_relu(h, pack_ref[0:64, 66:67], pack_ref[0:64, 67:68])

    # --- layer 3: Conv1d(64 -> C) ---
    w3 = pack_ref[64:64 + channels, 0:64]                     # (C, 64)
    b3 = pack_ref[0:channels, 68:69]                          # (C, 1)
    y = jnp.dot(w3, h, preferred_element_type=jnp.float32) + b3
    o_ref[...] = y.astype(o_ref.dtype)                        # lane-dense stores


# ----------------------------- packing & wrapper ------------------------------
def _pack_params(params, channels, cpad):
    """Pack all kernel parameters into one padded f32 array (1 DMA instead of 9)."""
    rows = 64 + cpad + 32
    pack = jnp.zeros((rows, 72), jnp.float32)
    pack = pack.at[0:64, 0:32].set(params["w2"])
    pack = pack.at[64:64 + channels, 0:64].set(params["w3"])
    pack = pack.at[64 + cpad:64 + cpad + 32, 0:2].set(params["w1"])
    pack = pack.at[0:32, 64:65].set(params["g1"])
    pack = pack.at[0:32, 65:66].set(params["be1"])
    pack = pack.at[0:64, 66:67].set(params["g2"])
    pack = pack.at[0:64, 67:68].set(params["be2"])
    pack = pack.at[0:channels, 68:69].set(params["b3"])
    return pack


def init_project_forward(params, x_ncl):
    """InitProject forward.  x_ncl: (B, 2, L) NCL -> (B, channels, L) NCL."""
    B, cin, L = x_ncl.shape
    assert cin == 2
    channels = params["w3"].shape[0]
    assert channels % 8 == 0
    cpad = (-(-channels // 8)) * 8
    M = B * L

    # Layout plumbing outside the kernel (tiny XLA ops): lane-dense (2, M) input.
    x_flat = jnp.transpose(x_ncl, (1, 0, 2)).reshape(cin, M)
    pack = _pack_params(params, channels, cpad)

    y = pl.pallas_call(
        functools.partial(_init_project_kernel, eps=BN_EPS,
                          channels=channels, cpad=cpad),
        out_shape=jax.ShapeDtypeStruct((channels, M), x_ncl.dtype),
        compiler_params=pltpu.CompilerParams(vmem_limit_bytes=32 * 1024 * 1024),
    )(x_flat, pack)

    # (C, B*L) -> (B, C, L)
    return jnp.transpose(y.reshape(channels, B, L), (1, 0, 2))


# ----------------------------- parameter init --------------------------------
def init_project_init(key, channels=NET_CHANNELS):
    ks = jax.random.split(key, 10)

    def conv_w(k, cout, cin):
        # Stored as (Cout, Cin) == PyTorch Conv1d(k=1) weight squeezed.
        return jax.random.normal(k, (cout, cin), jnp.float32) / math.sqrt(cin)

    return {
        "w1": conv_w(ks[0], 32, 2),
        "cb1": 0.01 * jax.random.normal(ks[1], (32, 1), jnp.float32),   # reference-only
        "g1": 1.0 + 0.1 * jax.random.normal(ks[2], (32, 1), jnp.float32),
        "be1": 0.1 * jax.random.normal(ks[3], (32, 1), jnp.float32),
        "w2": conv_w(ks[4], 64, 32),
        "cb2": 0.01 * jax.random.normal(ks[5], (64, 1), jnp.float32),   # reference-only
        "g2": 1.0 + 0.1 * jax.random.normal(ks[6], (64, 1), jnp.float32),
        "be2": 0.1 * jax.random.normal(ks[7], (64, 1), jnp.float32),
        "w3": conv_w(ks[8], channels, 64),
        "b3": 0.01 * jax.random.normal(ks[9], (channels, 1), jnp.float32),
    }


# ----------------------------- pure-JAX reference -----------------------------
def _reference_forward(params, x_ncl):
    """Exact module semantics: conv WITH biases, two-pass training-mode BN."""
    B, _, L = x_ncl.shape
    x = jnp.transpose(x_ncl, (1, 0, 2)).reshape(2, B * L)     # (2, M)

    def bn(h, g, b):
        mean = jnp.mean(h, axis=1, keepdims=True)
        var = jnp.mean((h - mean) ** 2, axis=1, keepdims=True)
        return (h - mean) * lax.rsqrt(var + BN_EPS) * g + b

    h = params["w1"] @ x + params["cb1"]
    h = jnp.maximum(bn(h, params["g1"], params["be1"]), 0.0)
    h = params["w2"] @ h + params["cb2"]
    h = jnp.maximum(bn(h, params["g2"], params["be2"]), 0.0)
    y = params["w3"] @ h + params["b3"]
    return jnp.transpose(y.reshape(-1, B, L), (1, 0, 2))      # (B, C, L)


# ----------------------------- main -------------------------------------------
if __name__ == "__main__":
    key = jax.random.PRNGKey(0)
    k_data, k_param = jax.random.split(key)

    B, L = 2, 64                                    # B*L = 128 lane-dense positions
    x = jax.random.normal(k_data, (B, 2, L), jnp.float32)     # NCL, like nn.Conv1d input
    params = init_project_init(k_param, channels=NET_CHANNELS)

    out = jax.block_until_ready(init_project_forward(params, x))   # (B, 32, L)
    ref = jax.block_until_ready(_reference_forward(params, x))

    assert out.shape == (B, NET_CHANNELS, L)
    assert bool(jnp.all(jnp.isfinite(out)))
    assert bool(jnp.allclose(out, ref, atol=1e-2, rtol=1e-2)), "mismatch vs reference"

    print("KERNEL_OK")
</pallas_src>

<mosaic_0001>
module attributes {stable_mosaic.version = 11 : i64} {
  func.func @_init_project_kernel(%arg0: memref<2x128xf32, #tpu.memory_space<vmem>>, %arg1: memref<128x72xf32, #tpu.memory_space<vmem>>, %arg2: memref<32x128xf32, #tpu.memory_space<vmem>>) attributes {dimension_semantics = [], scalar_prefetch = 0 : i64, scratch_operands = 0 : i64, tpu.core_type = #tpu.core_type<tc>} {
    %c0 = arith.constant 0 : index
    %c0_0 = arith.constant 0 : index
    %0 = vector.load %arg0[%c0, %c0_0] : memref<2x128xf32, #tpu.memory_space<vmem>>, vector<2x128xf32>
    %c96 = arith.constant 96 : index
    %c0_1 = arith.constant 0 : index
    %1 = vector.load %arg1[%c96, %c0_1] : memref<128x72xf32, #tpu.memory_space<vmem>>, vector<32x2xf32>
    %2 = vector.extract_strided_slice %1 {offsets = [0, 0], sizes = [32, 1], strides = [1, 1]} : vector<32x2xf32> to vector<32x1xf32>
    %3 = vector.extract_strided_slice %0 {offsets = [0, 0], sizes = [1, 128], strides = [1, 1]} : vector<2x128xf32> to vector<1x128xf32>
    %4 = vector.broadcast %2 : vector<32x1xf32> to vector<32x128xf32>
    %5 = vector.broadcast %3 : vector<1x128xf32> to vector<32x128xf32>
    %6 = arith.mulf %4, %5 : vector<32x128xf32>
    %7 = vector.extract_strided_slice %1 {offsets = [0, 1], sizes = [32, 1], strides = [1, 1]} : vector<32x2xf32> to vector<32x1xf32>
    %8 = vector.extract_strided_slice %0 {offsets = [1, 0], sizes = [1, 128], strides = [1, 1]} : vector<2x128xf32> to vector<1x128xf32>
    %9 = vector.broadcast %7 : vector<32x1xf32> to vector<32x128xf32>
    %10 = vector.broadcast %8 : vector<1x128xf32> to vector<32x128xf32>
    %11 = arith.mulf %9, %10 : vector<32x128xf32>
    %12 = arith.addf %6, %11 : vector<32x128xf32>
    %c0_2 = arith.constant 0 : index
    %c64 = arith.constant 64 : index
    %13 = vector.load %arg1[%c0_2, %c64] : memref<128x72xf32, #tpu.memory_space<vmem>>, vector<32x1xf32>
    %c0_3 = arith.constant 0 : index
    %c65 = arith.constant 65 : index
    %14 = vector.load %arg1[%c0_3, %c65] : memref<128x72xf32, #tpu.memory_space<vmem>>, vector<32x1xf32>
    %cst = arith.constant dense<0.000000e+00> : vector<32xf32>
    %15 = vector.multi_reduction <add>, %12, %cst [1] : vector<32x128xf32> to vector<32xf32>
    %16 = vector.shape_cast %15 : vector<32xf32> to vector<32x1xf32>
    %cst_4 = arith.constant 7.812500e-03 : f32
    %17 = vector.broadcast %cst_4 : f32 to vector<32x1xf32>
    %18 = arith.mulf %16, %17 : vector<32x1xf32>
    %19 = arith.mulf %12, %12 : vector<32x128xf32>
    %cst_5 = arith.constant dense<0.000000e+00> : vector<32xf32>
    %20 = vector.multi_reduction <add>, %19, %cst_5 [1] : vector<32x128xf32> to vector<32xf32>
    %21 = vector.shape_cast %20 : vector<32xf32> to vector<32x1xf32>
    %cst_6 = arith.constant 7.812500e-03 : f32
    %22 = vector.broadcast %cst_6 : f32 to vector<32x1xf32>
    %23 = arith.mulf %21, %22 : vector<32x1xf32>
    %24 = arith.mulf %18, %18 : vector<32x1xf32>
    %25 = arith.subf %23, %24 : vector<32x1xf32>
    %cst_7 = arith.constant 9.99999974E-6 : f32
    %26 = vector.broadcast %cst_7 : f32 to vector<32x1xf32>
    %27 = arith.addf %25, %26 : vector<32x1xf32>
    %28 = math.rsqrt %27 : vector<32x1xf32>
    %29 = arith.mulf %13, %28 : vector<32x1xf32>
    %30 = arith.mulf %18, %29 : vector<32x1xf32>
    %31 = arith.subf %14, %30 : vector<32x1xf32>
    %32 = vector.broadcast %29 : vector<32x1xf32> to vector<32x128xf32>
    %33 = arith.mulf %12, %32 : vector<32x128xf32>
    %34 = vector.broadcast %31 : vector<32x1xf32> to vector<32x128xf32>
    %35 = arith.addf %33, %34 : vector<32x128xf32>
    %cst_8 = arith.constant 0.000000e+00 : f32
    %36 = vector.broadcast %cst_8 : f32 to vector<32x128xf32>
    %37 = arith.maximumf %35, %36 : vector<32x128xf32>
    %c0_9 = arith.constant 0 : index
    %c0_10 = arith.constant 0 : index
    %38 = vector.load %arg1[%c0_9, %c0_10] : memref<128x72xf32, #tpu.memory_space<vmem>>, vector<64x32xf32>
    %cst_11 = arith.constant dense<0.000000e+00> : vector<64x128xf32>
    %39 = tpu.matmul %38, %37, %cst_11 {dimension_numbers = #tpu.dot_dimension_numbers<[1], [0], [0], [1], [0, 0, 1, 1], [], []>} : vector<64x32xf32>, vector<32x128xf32>, vector<64x128xf32> -> vector<64x128xf32>
    %c0_12 = arith.constant 0 : index
    %c66 = arith.constant 66 : index
    %40 = vector.load %arg1[%c0_12, %c66] : memref<128x72xf32, #tpu.memory_space<vmem>>, vector<64x1xf32>
    %c0_13 = arith.constant 0 : index
    %c67 = arith.constant 67 : index
    %41 = vector.load %arg1[%c0_13, %c67] : memref<128x72xf32, #tpu.memory_space<vmem>>, vector<64x1xf32>
    %cst_14 = arith.constant dense<0.000000e+00> : vector<64xf32>
    %42 = vector.multi_reduction <add>, %39, %cst_14 [1] : vector<64x128xf32> to vector<64xf32>
    %43 = vector.shape_cast %42 : vector<64xf32> to vector<64x1xf32>
    %cst_15 = arith.constant 7.812500e-03 : f32
    %44 = vector.broadcast %cst_15 : f32 to vector<64x1xf32>
    %45 = arith.mulf %43, %44 : vector<64x1xf32>
    %46 = arith.mulf %39, %39 : vector<64x128xf32>
    %cst_16 = arith.constant dense<0.000000e+00> : vector<64xf32>
    %47 = vector.multi_reduction <add>, %46, %cst_16 [1] : vector<64x128xf32> to vector<64xf32>
    %48 = vector.shape_cast %47 : vector<64xf32> to vector<64x1xf32>
    %cst_17 = arith.constant 7.812500e-03 : f32
    %49 = vector.broadcast %cst_17 : f32 to vector<64x1xf32>
    %50 = arith.mulf %48, %49 : vector<64x1xf32>
    %51 = arith.mulf %45, %45 : vector<64x1xf32>
    %52 = arith.subf %50, %51 : vector<64x1xf32>
    %cst_18 = arith.constant 9.99999974E-6 : f32
    %53 = vector.broadcast %cst_18 : f32 to vector<64x1xf32>
    %54 = arith.addf %52, %53 : vector<64x1xf32>
    %55 = math.rsqrt %54 : vector<64x1xf32>
    %56 = arith.mulf %40, %55 : vector<64x1xf32>
    %57 = arith.mulf %45, %56 : vector<64x1xf32>
    %58 = arith.subf %41, %57 : vector<64x1xf32>
    %59 = vector.broadcast %56 : vector<64x1xf32> to vector<64x128xf32>
    %60 = arith.mulf %39, %59 : vector<64x128xf32>
    %61 = vector.broadcast %58 : vector<64x1xf32> to vector<64x128xf32>
    %62 = arith.addf %60, %61 : vector<64x128xf32>
    %cst_19 = arith.constant 0.000000e+00 : f32
    %63 = vector.broadcast %cst_19 : f32 to vector<64x128xf32>
    %64 = arith.maximumf %62, %63 : vector<64x128xf32>
    %c64_20 = arith.constant 64 : index
    %c0_21 = arith.constant 0 : index
    %65 = vector.load %arg1[%c64_20, %c0_21] : memref<128x72xf32, #tpu.memory_space<vmem>>, vector<32x64xf32>
    %c0_22 = arith.constant 0 : index
    %c68 = arith.constant 68 : index
    %66 = vector.load %arg1[%c0_22, %c68] : memref<128x72xf32, #tpu.memory_space<vmem>>, vector<32x1xf32>
    %cst_23 = arith.constant dense<0.000000e+00> : vector<32x128xf32>
    %67 = tpu.matmul %65, %64, %cst_23 {dimension_numbers = #tpu.dot_dimension_numbers<[1], [0], [0], [1], [0, 0, 1, 1], [], []>} : vector<32x64xf32>, vector<64x128xf32>, vector<32x128xf32> -> vector<32x128xf32>
    %68 = vector.broadcast %66 : vector<32x1xf32> to vector<32x128xf32>
    %69 = arith.addf %67, %68 : vector<32x128xf32>
    %c0_24 = arith.constant 0 : index
    %c0_25 = arith.constant 0 : index
    %70 = vector.load %arg2[%c0_24, %c0_25] : memref<32x128xf32, #tpu.memory_space<vmem>>, vector<32x128xf32>
    tpu.vector_store %arg2[%c0_24, %c0_25], %69 {strides = array<i32>} : memref<32x128xf32, #tpu.memory_space<vmem>>, vector<32x128xf32>,
    return
  }
}

</mosaic_0001>

<llo_original>
// kernel: tpu_custom_call.1
$region0: #{tpu_custom_call.1}
  #allocation0 [shape = 'u32[]', space=smem, size = 0x4, offset = 0x4, fixed_abs, tag = 'smem constant byte address 0x4 - core index']
  #allocation1 [shape = 'u32[144,128]{1,0:T(1,128)}', space=vmem, size = 0x12000, scoped, tag = 'internal scratch']
  %s0 = inlined_call_operand.vmem [shape: f32[2,128], index: 0, kind: input, shape index: {}]
  %s1 = inlined_call_operand.vmem [shape: f32[128,72], index: 1, kind: input, shape index: {}]
  %s2 = inlined_call_operand.hbm [shape: f32[32,128], index: 2, kind: output, shape index: {}]
  %s3 = sld [smem:[#allocation0]]
  $region18: #{tpu_custom_call.1} parent=0
    _
  %s5 = ssub.s32 1, %s3
  %s6 = scalar_select 0, %s5, %s3
  $region1: #{tpu_custom_call.1} parent=0
    #allocation2 [shape = 'u8[16384]{0}', space=vmem, size = 0x4000, scoped, tag = 'output window, operand 0, single buffered']
    #allocation3 [shape = 's32[1]{0}', space=sflag, size = 0x4, scoped, tag = 'scoped memory for tpu_custom_call.1']
    %7 = vsyncpa [#allocation3], 0
    // Predicated region
    $region2: #{tpu_custom_call.1} parent=1 // pred_check
      _
    $region3: #{tpu_custom_call.1} parent=1 // pred_check_branch
      %9 = sbr.rel (0) target = $region5
    $region4: #{tpu_custom_call.1} parent=1 // pred_region
      _
    $region5: #{tpu_custom_call.1} parent=1 // pred_fallthru
      _
    // Predicated region
    $region6: #{tpu_custom_call.1} parent=1 // pred_check
      _
    $region7: #{tpu_custom_call.1} parent=1 // pred_check_branch
      %11 = sbr.rel (0) target = $region9
    $region8: #{tpu_custom_call.1} parent=1 // pred_region
      _
    $region9: #{tpu_custom_call.1} parent=1 // pred_fallthru
      _
    %v12 = vld [vmem:[%s0] sm:$0x3]
    %v13 = vld [vmem:[%s1 + $0x60] sm:$0xff]
    %v14 = vld [vmem:[%s1 + $0x68] sm:$0xff]
    %v15 = vld [vmem:[%s1 + $0x70] sm:$0xff]
    %v16 = vld [vmem:[%s1 + $0x78] sm:$0xff]
    %18 = vset.pattern.permute.xlu0 0
    %19 = vperm.xlu0 %18, %v13
    %v20 = vpop.permute.xlu0 %19
    %23 = vset.pattern.permute.xlu0 0
    %24 = vperm.xlu0 %23, %v14
    %v25 = vpop.permute.xlu0 %24
    %28 = vset.pattern.permute.xlu0 0
    %29 = vperm.xlu0 %28, %v15
    %v30 = vpop.permute.xlu0 %29
    %33 = vset.pattern.permute.xlu0 0
    %34 = vperm.xlu0 %33, %v16
    %v35 = vpop.permute.xlu0 %34
    %v37 = vlaneseq
    %v38 = vshrl.u32 %v37, 7
    %v39 = vsub.s32 0, %v38
    %v40 = vrot.slane %v12, %v39
    %v41 = vmul.f32 %v20, %v40
    %v42 = vmul.f32 %v25, %v40
    %v43 = vmul.f32 %v30, %v40
    %v44 = vmul.f32 %v35, %v40
    %45 = vset.pattern.permute.xlu0 1
    %46 = vperm.xlu0 %45, %v13
    %v47 = vpop.permute.xlu0 %46
    %49 = vset.pattern.permute.xlu0 1
    %50 = vperm.xlu0 %49, %v14
    %v51 = vpop.permute.xlu0 %50
    %53 = vset.pattern.permute.xlu0 1
    %54 = vperm.xlu0 %53, %v15
    %v55 = vpop.permute.xlu0 %54
    %57 = vset.pattern.permute.xlu0 1
    %58 = vperm.xlu0 %57, %v16
    %v59 = vpop.permute.xlu0 %58
    %v61 = vlaneseq
    %v62 = vshrl.u32 %v61, 7
    %v63 = vsub.s32 1, %v62
    %v64 = vrot.slane %v12, %v63
    %v65 = vmul.f32 %v47, %v64
    %v66 = vmul.f32 %v51, %v64
    %v67 = vmul.f32 %v55, %v64
    %v68 = vmul.f32 %v59, %v64
    %v69 = vadd.f32 %v41, %v65
    %v70 = vadd.f32 %v42, %v66
    %v71 = vadd.f32 %v43, %v67
    %v72 = vadd.f32 %v44, %v68
    %v73 = vld [vmem:[%s1] sm:$0xff]
    %v74 = vld [vmem:[%s1 + $0x8] sm:$0xff]
    %v75 = vld [vmem:[%s1 + $0x10] sm:$0xff]
    %v76 = vld [vmem:[%s1 + $0x18] sm:$0xff]
    %77 = vadd.xlane.f32.xlu0 %v69
    %v78 = vpop.xlane.xlu0 %77
    %79 = vadd.xlane.f32.xlu0 %v70
    %v80 = vpop.xlane.xlu0 %79
    %81 = vadd.xlane.f32.xlu0 %v71
    %v82 = vpop.xlane.xlu0 %81
    %83 = vadd.xlane.f32.xlu0 %v72
    %v84 = vpop.xlane.xlu0 %83
    %v85 = vmul.f32 %v78, 0.0078125
    %v86 = vmul.f32 %v80, 0.0078125
    %v87 = vmul.f32 %v82, 0.0078125
    %v88 = vmul.f32 %v84, 0.0078125
    %v89 = vmul.f32 %v69, %v69
    %v90 = vmul.f32 %v70, %v70
    %v91 = vmul.f32 %v71, %v71
    %v92 = vmul.f32 %v72, %v72
    %93 = vadd.xlane.f32.xlu0 %v89
    %v94 = vpop.xlane.xlu0 %93
    %95 = vadd.xlane.f32.xlu0 %v90
    %v96 = vpop.xlane.xlu0 %95
    %97 = vadd.xlane.f32.xlu0 %v91
    %v98 = vpop.xlane.xlu0 %97
    %99 = vadd.xlane.f32.xlu0 %v92
    %v100 = vpop.xlane.xlu0 %99
    %v101 = vmul.f32 %v94, 0.0078125
    %v102 = vmul.f32 %v96, 0.0078125
    %v103 = vmul.f32 %v98, 0.0078125
    %v104 = vmul.f32 %v100, 0.0078125
    %v105 = vmul.f32 %v85, %v85
    %v106 = vmul.f32 %v86, %v86
    %v107 = vmul.f32 %v87, %v87
    %v108 = vmul.f32 %v88, %v88
    %v109 = vsub.f32 %v101, %v105
    %v110 = vsub.f32 %v102, %v106
    %v111 = vsub.f32 %v103, %v107
    %v112 = vsub.f32 %v104, %v108
    %v113 = vadd.f32 %v109, 1e-05
    %v114 = vadd.f32 %v110, 1e-05
    %v115 = vadd.f32 %v111, 1e-05
    %v116 = vadd.f32 %v112, 1e-05
    %v117 = vrsqrt.pop %v113
    %v118 = vrsqrt.pop %v114
    %v119 = vrsqrt.pop %v115
    %v120 = vrsqrt.pop %v116
    %v121 = vmul.f32 %v73, %v117
    %v122 = vmul.f32 %v74, %v118
    %v123 = vmul.f32 %v75, %v119
    %v124 = vmul.f32 %v76, %v120
    %v125 = vmul.f32 %v85, %v121
    %v126 = vmul.f32 %v86, %v122
    %v127 = vmul.f32 %v87, %v123
    %v128 = vmul.f32 %v88, %v124
    %133 = vrot.lane.b32.xlu0 %v125, 1
    %v134 = vpop.permute.xlu0 %133
    %135 = vrot.lane.b32.xlu0 %v126, 1
    %v136 = vpop.permute.xlu0 %135
    %137 = vrot.lane.b32.xlu0 %v127, 1
    %v138 = vpop.permute.xlu0 %137
    %139 = vrot.lane.b32.xlu0 %v128, 1
    %v140 = vpop.permute.xlu0 %139
    %v145 = vsub.f32 %v73, %v134
    %v146 = vsub.f32 %v74, %v136
    %v147 = vsub.f32 %v75, %v138
    %v148 = vsub.f32 %v76, %v140
    %150 = vset.pattern.permute.xlu0 64
    %151 = vperm.xlu0 %150, %v121
    %v152 = vpop.permute.xlu0 %151
    %155 = vset.pattern.permute.xlu0 64
    %156 = vperm.xlu0 %155, %v122
    %v157 = vpop.permute.xlu0 %156
    %160 = vset.pattern.permute.xlu0 64
    %161 = vperm.xlu0 %160, %v123
    %v162 = vpop.permute.xlu0 %161
    %165 = vset.pattern.permute.xlu0 64
    %166 = vperm.xlu0 %165, %v124
    %v167 = vpop.permute.xlu0 %166
    %v169 = vmul.f32 %v69, %v152
    %v170 = vmul.f32 %v70, %v157
    %v171 = vmul.f32 %v71, %v162
    %v172 = vmul.f32 %v72, %v167
    %174 = vset.pattern.permute.xlu0 65
    %175 = vperm.xlu0 %174, %v145
    %v176 = vpop.permute.xlu0 %175
    %179 = vset.pattern.permute.xlu0 65
    %180 = vperm.xlu0 %179, %v146
    %v181 = vpop.permute.xlu0 %180
    %184 = vset.pattern.permute.xlu0 65
    %185 = vperm.xlu0 %184, %v147
    %v186 = vpop.permute.xlu0 %185
    %189 = vset.pattern.permute.xlu0 65
    %190 = vperm.xlu0 %189, %v148
    %v191 = vpop.permute.xlu0 %190
    %v193 = vadd.f32 %v169, %v176
    %v194 = vadd.f32 %v170, %v181
    %v195 = vadd.f32 %v171, %v186
    %v196 = vadd.f32 %v172, %v191
    %v197 = vmax.f32 %v193, 0.0
    %v198 = vmax.f32 %v194, 0.0
    %v199 = vmax.f32 %v195, 0.0
    %v200 = vmax.f32 %v196, 0.0
    %v201 = vld [vmem:[%s1] sm:$0xff]
    %v202 = vld [vmem:[%s1 + $0x8] sm:$0xff]
    %v203 = vld [vmem:[%s1 + $0x10] sm:$0xff]
    %v204 = vld [vmem:[%s1 + $0x18] sm:$0xff]
    %v205 = vld [vmem:[%s1 + $0x20] sm:$0xff]
    %v206 = vld [vmem:[%s1 + $0x28] sm:$0xff]
    %v207 = vld [vmem:[%s1 + $0x30] sm:$0xff]
    %v208 = vld [vmem:[%s1 + $0x38] sm:$0xff]
    %vm209 = vcmask 261120
    %v211 = vsel %vm209, %v201, 0
    %v214 = vsel %vm209, %v202, 0
    %v217 = vsel %vm209, %v203, 0
    %v220 = vsel %vm209, %v204, 0
    %v223 = vsel %vm209, %v205, 0
    %v226 = vsel %vm209, %v206, 0
    %v229 = vsel %vm209, %v207, 0
    %v232 = vsel %vm209, %v208, 0
    %234 = vmatprep.subr.mxu0 0.0
    %235 = vmatpush1.msra.mxu0 0.0
    %236 = vmatprep.subr.mxu0 0.0
    %237 = vmatpush1.msra.mxu0 0.0
    %238 = vmatprep.subr.mxu0 0.0
    %239 = vmatpush1.msra.mxu0 0.0
    %240 = vmatprep.subr.mxu0 0.0
    %241 = vmatpush1.msra.mxu0 0.0
    %242 = vmatprep.subr.mxu0 0.0
    %243 = vmatpush1.msra.mxu0 0.0
    %244 = vmatprep.subr.mxu0 0.0
    %245 = vmatpush1.msra.mxu0 0.0
    %246 = vmatprep.subr.mxu0 0.0
    %247 = vmatpush1.msra.mxu0 0.0
    %248 = vmatprep.subr.mxu0 0.0
    %249 = vmatpush1.msra.mxu0 0.0
    %250 = vmatprep.subr.mxu0 0.0
    %251 = vmatpush1.msra.mxu0 0.0
    %252 = vmatprep.subr.mxu0 0.0
    %253 = vmatpush1.msra.mxu0 0.0
    %254 = vmatprep.subr.mxu0 0.0
    %255 = vmatpush1.msra.mxu0 0.0
    %256 = vmatprep.subr.mxu0 0.0
    %257 = vmatpush1.msra.mxu0 0.0
    %258 = vmatprep.subr.mxu0 0.0
    %259 = vmatpush1.msra.mxu0 %v200
    %260 = vmatprep.subr.mxu0 0.0
    %261 = vmatpush1.msra.mxu0 %v199
    %262 = vmatprep.subr.mxu0 0.0
    %263 = vmatpush1.msra.mxu0 %v198
    %264 = vmatprep.subr.mxu0 0.0
    %265 = vmatpush1.msra.mxu0 %v197
    %266 = vmatprep.subr.mxu0 0.0
    %267 = vmatpush2.msra.mxu0 0.0
    %268 = vmatprep.subr.mxu0 0.0
    %269 = vmatpush2.msra.mxu0 0.0
    %270 = vmatprep.subr.mxu0 0.0
    %271 = vmatpush2.msra.mxu0 0.0
    %272 = vmatprep.subr.mxu0 0.0
    %273 = vmatpush2.msra.mxu0 0.0
    %274 = vmatprep.subr.mxu0 0.0
    %275 = vmatpush2.msra.mxu0 0.0
    %276 = vmatprep.subr.mxu0 0.0
    %277 = vmatpush2.msra.mxu0 0.0
    %278 = vmatprep.subr.mxu0 0.0
    %279 = vmatpush2.msra.mxu0 0.0
    %280 = vmatprep.subr.mxu0 0.0
    %281 = vmatpush2.msra.mxu0 0.0
    %282 = vmatprep.subr.mxu0 0.0
    %283 = vmatpush2.msra.mxu0 0.0
    %284 = vmatprep.subr.mxu0 0.0
    %285 = vmatpush2.msra.mxu0 0.0
    %286 = vmatprep.subr.mxu0 0.0
    %287 = vmatpush2.msra.mxu0 0.0
    %288 = vmatprep.subr.mxu0 0.0
    %289 = vmatpush2.msra.mxu0 0.0
    %290 = vmatprep.subr.mxu0 0.0
    %291 = vmatpush2.msra.mxu0 0.0
    %292 = vmatprep.subr.mxu0 0.0
    %293 = vmatpush2.msra.mxu0 0.0
    %294 = vmatprep.subr.mxu0 0.0
    %295 = vmatpush2.msra.mxu0 0.0
    %296 = vmatprep.subr.mxu0 0.0
    %297 = vmatpush2.msra.mxu0 0.0
    %298 = vmatprep.mubr.f32.mxu0 0.0
    %299 = vmatmul.mubr.f32.gmra.mxu0 %v211
    %v300 = vpop.f32.mrf.mxu0
    %v301 = vadd.f32 0.0, %v300
    %v302 = vpop.f32.mrf.mxu0
    %303 = vmatprep.mubr.f32.mxu0 0.0
    %304 = vmatmul.mubr.f32.gmra.mxu0 %v214
    %v305 = vpop.f32.mrf.mxu0
    %v306 = vadd.f32 0.0, %v305
    %v307 = vpop.f32.mrf.mxu0
    %308 = vmatprep.mubr.f32.mxu0 0.0
    %309 = vmatmul.mubr.f32.gmra.mxu0 %v217
    %v310 = vpop.f32.mrf.mxu0
    %v311 = vadd.f32 0.0, %v310
    %v312 = vpop.f32.mrf.mxu0
    %313 = vmatprep.mubr.f32.mxu0 0.0
    %314 = vmatmul.mubr.f32.gmra.mxu0 %v220
    %v315 = vpop.f32.mrf.mxu0
    %v316 = vadd.f32 0.0, %v315
    %v317 = vpop.f32.mrf.mxu0
    %318 = vmatprep.mubr.f32.mxu0 0.0
    %319 = vmatmul.mubr.f32.gmra.mxu0 %v223
    %v320 = vpop.f32.mrf.mxu0
    %v321 = vadd.f32 0.0, %v320
    %v322 = vpop.f32.mrf.mxu0
    %323 = vmatprep.mubr.f32.mxu0 0.0
    %324 = vmatmul.mubr.f32.gmra.mxu0 %v226
    %v325 = vpop.f32.mrf.mxu0
    %v326 = vadd.f32 0.0, %v325
    %v327 = vpop.f32.mrf.mxu0
    %328 = vmatprep.mubr.f32.mxu0 0.0
    %329 = vmatmul.mubr.f32.gmra.mxu0 %v229
    %v330 = vpop.f32.mrf.mxu0
    %v331 = vadd.f32 0.0, %v330
    %v332 = vpop.f32.mrf.mxu0
    %333 = vmatprep.mubr.f32.mxu0 0.0
    %334 = vmatmul.mubr.f32.gmra.mxu0 %v232
    %v335 = vpop.f32.mrf.mxu0
    %v336 = vadd.f32 0.0, %v335
    %v337 = vpop.f32.mrf.mxu0
    %338 = vdwg.mxu0
    %339 = vadd.xlane.f32.xlu0 %v301
    %v340 = vpop.xlane.xlu0 %339
    %341 = vadd.xlane.f32.xlu0 %v306
    %v342 = vpop.xlane.xlu0 %341
    %343 = vadd.xlane.f32.xlu0 %v311
    %v344 = vpop.xlane.xlu0 %343
    %345 = vadd.xlane.f32.xlu0 %v316
    %v346 = vpop.xlane.xlu0 %345
    %347 = vadd.xlane.f32.xlu0 %v321
    %v348 = vpop.xlane.xlu0 %347
    %349 = vadd.xlane.f32.xlu0 %v326
    %v350 = vpop.xlane.xlu0 %349
    %351 = vadd.xlane.f32.xlu0 %v331
    %v352 = vpop.xlane.xlu0 %351
    %353 = vadd.xlane.f32.xlu0 %v336
    %v354 = vpop.xlane.xlu0 %353
    %v355 = vmul.f32 %v340, 0.0078125
    %v356 = vmul.f32 %v342, 0.0078125
    %v357 = vmul.f32 %v344, 0.0078125
    %v358 = vmul.f32 %v346, 0.0078125
    %v359 = vmul.f32 %v348, 0.0078125
    %v360 = vmul.f32 %v350, 0.0078125
    %v361 = vmul.f32 %v352, 0.0078125
    %v362 = vmul.f32 %v354, 0.0078125
    %v363 = vmul.f32 %v301, %v301
    %v364 = vmul.f32 %v306, %v306
    %v365 = vmul.f32 %v311, %v311
    %v366 = vmul.f32 %v316, %v316
    %v367 = vmul.f32 %v321, %v321
    %v368 = vmul.f32 %v326, %v326
    %v369 = vmul.f32 %v331, %v331
    %v370 = vmul.f32 %v336, %v336
    %371 = vadd.xlane.f32.xlu0 %v363
    %v372 = vpop.xlane.xlu0 %371
    %373 = vadd.xlane.f32.xlu0 %v364
    %v374 = vpop.xlane.xlu0 %373
    %375 = vadd.xlane.f32.xlu0 %v365
    %v376 = vpop.xlane.xlu0 %375
    %377 = vadd.xlane.f32.xlu0 %v366
    %v378 = vpop.xlane.xlu0 %377
    %379 = vadd.xlane.f32.xlu0 %v367
    %v380 = vpop.xlane.xlu0 %379
    %381 = vadd.xlane.f32.xlu0 %v368
    %v382 = vpop.xlane.xlu0 %381
    %383 = vadd.xlane.f32.xlu0 %v369
    %v384 = vpop.xlane.xlu0 %383
    %385 = vadd.xlane.f32.xlu0 %v370
    %v386 = vpop.xlane.xlu0 %385
    %v387 = vmul.f32 %v372, 0.0078125
    %v388 = vmul.f32 %v374, 0.0078125
    %v389 = vmul.f32 %v376, 0.0078125
    %v390 = vmul.f32 %v378, 0.0078125
    %v391 = vmul.f32 %v380, 0.0078125
    %v392 = vmul.f32 %v382, 0.0078125
    %v393 = vmul.f32 %v384, 0.0078125
    %v394 = vmul.f32 %v386, 0.0078125
    %v395 = vmul.f32 %v355, %v355
    %v396 = vmul.f32 %v356, %v356
    %v397 = vmul.f32 %v357, %v357
    %v398 = vmul.f32 %v358, %v358
    %v399 = vmul.f32 %v359, %v359
    %v400 = vmul.f32 %v360, %v360
    %v401 = vmul.f32 %v361, %v361
    %v402 = vmul.f32 %v362, %v362
    %v403 = vsub.f32 %v387, %v395
    %v404 = vsub.f32 %v388, %v396
    %v405 = vsub.f32 %v389, %v397
    %v406 = vsub.f32 %v390, %v398
    %v407 = vsub.f32 %v391, %v399
    %v408 = vsub.f32 %v392, %v400
    %v409 = vsub.f32 %v393, %v401
    %v410 = vsub.f32 %v394, %v402
    %v411 = vadd.f32 %v403, 1e-05
    %v412 = vadd.f32 %v404, 1e-05
    %v413 = vadd.f32 %v405, 1e-05
    %v414 = vadd.f32 %v406, 1e-05
    %v415 = vadd.f32 %v407, 1e-05
    %v416 = vadd.f32 %v408, 1e-05
    %v417 = vadd.f32 %v409, 1e-05
    %v418 = vadd.f32 %v410, 1e-05
    %v419 = vrsqrt.pop %v411
    %v420 = vrsqrt.pop %v412
    %v421 = vrsqrt.pop %v413
    %v422 = vrsqrt.pop %v414
    %v423 = vrsqrt.pop %v415
    %v424 = vrsqrt.pop %v416
    %v425 = vrsqrt.pop %v417
    %v426 = vrsqrt.pop %v418
    %v427 = vmul.f32 %v201, %v419
    %v428 = vmul.f32 %v202, %v420
    %v429 = vmul.f32 %v203, %v421
    %v430 = vmul.f32 %v204, %v422
    %v431 = vmul.f32 %v205, %v423
    %v432 = vmul.f32 %v206, %v424
    %v433 = vmul.f32 %v207, %v425
    %v434 = vmul.f32 %v208, %v426
    %v435 = vmul.f32 %v355, %v427
    %v436 = vmul.f32 %v356, %v428
    %v437 = vmul.f32 %v357, %v429
    %v438 = vmul.f32 %v358, %v430
    %v439 = vmul.f32 %v359, %v431
    %v440 = vmul.f32 %v360, %v432
    %v441 = vmul.f32 %v361, %v433
    %v442 = vmul.f32 %v362, %v434
    %451 = vrot.lane.b32.xlu0 %v435, 1
    %v452 = vpop.permute.xlu0 %451
    %453 = vrot.lane.b32.xlu0 %v436, 1
    %v454 = vpop.permute.xlu0 %453
    %455 = vrot.lane.b32.xlu0 %v437, 1
    %v456 = vpop.permute.xlu0 %455
    %457 = vrot.lane.b32.xlu0 %v438, 1
    %v458 = vpop.permute.xlu0 %457
    %459 = vrot.lane.b32.xlu0 %v439, 1
    %v460 = vpop.permute.xlu0 %459
    %461 = vrot.lane.b32.xlu0 %v440, 1
    %v462 = vpop.permute.xlu0 %461
    %463 = vrot.lane.b32.xlu0 %v441, 1
    %v464 = vpop.permute.xlu0 %463
    %465 = vrot.lane.b32.xlu0 %v442, 1
    %v466 = vpop.permute.xlu0 %465
    %v475 = vsub.f32 %v201, %v452
    %v476 = vsub.f32 %v202, %v454
    %v477 = vsub.f32 %v203, %v456
    %v478 = vsub.f32 %v204, %v458
    %v479 = vsub.f32 %v205, %v460
    %v480 = vsub.f32 %v206, %v462
    %v481 = vsub.f32 %v207, %v464
    %v482 = vsub.f32 %v208, %v466
    %484 = vset.pattern.permute.xlu0 66
    %485 = vperm.xlu0 %484, %v427
    %v486 = vpop.permute.xlu0 %485
    %489 = vset.pattern.permute.xlu0 66
    %490 = vperm.xlu0 %489, %v428
    %v491 = vpop.permute.xlu0 %490
    %494 = vset.pattern.permute.xlu0 66
    %495 = vperm.xlu0 %494, %v429
    %v496 = vpop.permute.xlu0 %495
    %499 = vset.pattern.permute.xlu0 66
    %500 = vperm.xlu0 %499, %v430
    %v501 = vpop.permute.xlu0 %500
    %504 = vset.pattern.permute.xlu0 66
    %505 = vperm.xlu0 %504, %v431
    %v506 = vpop.permute.xlu0 %505
    %509 = vset.pattern.permute.xlu0 66
    %510 = vperm.xlu0 %509, %v432
    %v511 = vpop.permute.xlu0 %510
    %514 = vset.pattern.permute.xlu0 66
    %515 = vperm.xlu0 %514, %v433
    %v516 = vpop.permute.xlu0 %515
    %519 = vset.pattern.permute.xlu0 66
    %520 = vperm.xlu0 %519, %v434
    %v521 = vpop.permute.xlu0 %520
    %v523 = vmul.f32 %v301, %v486
    %v524 = vmul.f32 %v306, %v491
    %v525 = vmul.f32 %v311, %v496
    %v526 = vmul.f32 %v316, %v501
    %v527 = vmul.f32 %v321, %v506
    %v528 = vmul.f32 %v326, %v511
    %v529 = vmul.f32 %v331, %v516
    %v530 = vmul.f32 %v336, %v521
    %532 = vset.pattern.permute.xlu0 67
    %533 = vperm.xlu0 %532, %v475
    %v534 = vpop.permute.xlu0 %533
    %537 = vset.pattern.permute.xlu0 67
    %538 = vperm.xlu0 %537, %v476
    %v539 = vpop.permute.xlu0 %538
    %542 = vset.pattern.permute.xlu0 67
    %543 = vperm.xlu0 %542, %v477
    %v544 = vpop.permute.xlu0 %543
    %547 = vset.pattern.permute.xlu0 67
    %548 = vperm.xlu0 %547, %v478
    %v549 = vpop.permute.xlu0 %548
    %552 = vset.pattern.permute.xlu0 67
    %553 = vperm.xlu0 %552, %v479
    %v554 = vpop.permute.xlu0 %553
    %557 = vset.pattern.permute.xlu0 67
    %558 = vperm.xlu0 %557, %v480
    %v559 = vpop.permute.xlu0 %558
    %562 = vset.pattern.permute.xlu0 67
    %563 = vperm.xlu0 %562, %v481
    %v564 = vpop.permute.xlu0 %563
    %567 = vset.pattern.permute.xlu0 67
    %568 = vperm.xlu0 %567, %v482
    %v569 = vpop.permute.xlu0 %568
    %v571 = vadd.f32 %v523, %v534
    %v572 = vadd.f32 %v524, %v539
    %v573 = vadd.f32 %v525, %v544
    %v574 = vadd.f32 %v526, %v549
    %v575 = vadd.f32 %v527, %v554
    %v576 = vadd.f32 %v528, %v559
    %v577 = vadd.f32 %v529, %v564
    %v578 = vadd.f32 %v530, %v569
    %v579 = vmax.f32 %v571, 0.0
    %v580 = vmax.f32 %v572, 0.0
    %v581 = vmax.f32 %v573, 0.0
    %v582 = vmax.f32 %v574, 0.0
    %v583 = vmax.f32 %v575, 0.0
    %v584 = vmax.f32 %v576, 0.0
    %v585 = vmax.f32 %v577, 0.0
    %v586 = vmax.f32 %v578, 0.0
    %v587 = vld [vmem:[%s1 + $0x40] sm:$0xff]
    %v588 = vld [vmem:[%s1 + $0x48] sm:$0xff]
    %v589 = vld [vmem:[%s1 + $0x50] sm:$0xff]
    %v590 = vld [vmem:[%s1 + $0x58] sm:$0xff]
    %592 = vset.pattern.permute.xlu0 68
    %593 = vperm.xlu0 %592, %v73
    %v594 = vpop.permute.xlu0 %593
    %597 = vset.pattern.permute.xlu0 68
    %598 = vperm.xlu0 %597, %v74
    %v599 = vpop.permute.xlu0 %598
    %602 = vset.pattern.permute.xlu0 68
    %603 = vperm.xlu0 %602, %v75
    %v604 = vpop.permute.xlu0 %603
    %607 = vset.pattern.permute.xlu0 68
    %608 = vperm.xlu0 %607, %v76
    %v609 = vpop.permute.xlu0 %608
    %vm611 = vcmask 523264
    %v613 = vsel %vm611, %v587, 0
    %v616 = vsel %vm611, %v588, 0
    %v619 = vsel %vm611, %v589, 0
    %v622 = vsel %vm611, %v590, 0
    %624 = vmatprep.subr.mxu0 0.0
    %625 = vmatpush1.msra.mxu0 0.0
    %626 = vmatprep.subr.mxu0 0.0
    %627 = vmatpush1.msra.mxu0 0.0
    %628 = vmatprep.subr.mxu0 0.0
    %629 = vmatpush1.msra.mxu0 0.0
    %630 = vmatprep.subr.mxu0 0.0
    %631 = vmatpush1.msra.mxu0 0.0
    %632 = vmatprep.subr.mxu0 0.0
    %633 = vmatpush1.msra.mxu0 0.0
    %634 = vmatprep.subr.mxu0 0.0
    %635 = vmatpush1.msra.mxu0 0.0
    %636 = vmatprep.subr.mxu0 0.0
    %637 = vmatpush1.msra.mxu0 0.0
    %638 = vmatprep.subr.mxu0 0.0
    %639 = vmatpush1.msra.mxu0 0.0
    %640 = vmatprep.subr.mxu0 0.0
    %641 = vmatpush1.msra.mxu0 %v586
    %642 = vmatprep.subr.mxu0 0.0
    %643 = vmatpush1.msra.mxu0 %v585
    %644 = vmatprep.subr.mxu0 0.0
    %645 = vmatpush1.msra.mxu0 %v584
    %646 = vmatprep.subr.mxu0 0.0
    %647 = vmatpush1.msra.mxu0 %v583
    %648 = vmatprep.subr.mxu0 0.0
    %649 = vmatpush1.msra.mxu0 %v582
    %650 = vmatprep.subr.mxu0 0.0
    %651 = vmatpush1.msra.mxu0 %v581
    %652 = vmatprep.subr.mxu0 0.0
    %653 = vmatpush1.msra.mxu0 %v580
    %654 = vmatprep.subr.mxu0 0.0
    %655 = vmatpush1.msra.mxu0 %v579
    %656 = vmatprep.subr.mxu0 0.0
    %657 = vmatpush2.msra.mxu0 0.0
    %658 = vmatprep.subr.mxu0 0.0
    %659 = vmatpush2.msra.mxu0 0.0
    %660 = vmatprep.subr.mxu0 0.0
    %661 = vmatpush2.msra.mxu0 0.0
    %662 = vmatprep.subr.mxu0 0.0
    %663 = vmatpush2.msra.mxu0 0.0
    %664 = vmatprep.subr.mxu0 0.0
    %665 = vmatpush2.msra.mxu0 0.0
    %666 = vmatprep.subr.mxu0 0.0
    %667 = vmatpush2.msra.mxu0 0.0
    %668 = vmatprep.subr.mxu0 0.0
    %669 = vmatpush2.msra.mxu0 0.0
    %670 = vmatprep.subr.mxu0 0.0
    %671 = vmatpush2.msra.mxu0 0.0
    %672 = vmatprep.subr.mxu0 0.0
    %673 = vmatpush2.msra.mxu0 0.0
    %674 = vmatprep.subr.mxu0 0.0
    %675 = vmatpush2.msra.mxu0 0.0
    %676 = vmatprep.subr.mxu0 0.0
    %677 = vmatpush2.msra.mxu0 0.0
    %678 = vmatprep.subr.mxu0 0.0
    %679 = vmatpush2.msra.mxu0 0.0
    %680 = vmatprep.subr.mxu0 0.0
    %681 = vmatpush2.msra.mxu0 0.0
    %682 = vmatprep.subr.mxu0 0.0
    %683 = vmatpush2.msra.mxu0 0.0
    %684 = vmatprep.subr.mxu0 0.0
    %685 = vmatpush2.msra.mxu0 0.0
    %686 = vmatprep.subr.mxu0 0.0
    %687 = vmatpush2.msra.mxu0 0.0
    %688 = vmatprep.mubr.f32.mxu0 0.0
    %689 = vmatmul.mubr.f32.gmra.mxu0 %v613
    %v690 = vpop.f32.mrf.mxu0
    %v691 = vadd.f32 %v594, %v690
    %v692 = vpop.f32.mrf.mxu0
    %693 = vmatprep.mubr.f32.mxu0 0.0
    %694 = vmatmul.mubr.f32.gmra.mxu0 %v616
    %v695 = vpop.f32.mrf.mxu0
    %v696 = vadd.f32 %v599, %v695
    %v697 = vpop.f32.mrf.mxu0
    %698 = vmatprep.mubr.f32.mxu0 0.0
    %699 = vmatmul.mubr.f32.gmra.mxu0 %v619
    %v700 = vpop.f32.mrf.mxu0
    %v701 = vadd.f32 %v604, %v700
    %v702 = vpop.f32.mrf.mxu0
    %703 = vmatprep.mubr.f32.mxu0 0.0
    %704 = vmatmul.mubr.f32.gmra.mxu0 %v622
    %v705 = vpop.f32.mrf.mxu0
    %v706 = vadd.f32 %v609, %v705
    %v707 = vpop.f32.mrf.mxu0
    %708 = vdwg.mxu0
    %709 = vst [vmem:[#allocation2] sm:$0xff] %v691
    %710 = vst [vmem:[#allocation2 + $0x8] sm:$0xff] %v696
    %711 = vst [vmem:[#allocation2 + $0x10] sm:$0xff] %v701
    %712 = vst [vmem:[#allocation2 + $0x18] sm:$0xff] %v706
    // Predicated region
    $region10: #{tpu_custom_call.1} parent=1 // pred_check
      _
    $region11: #{tpu_custom_call.1} parent=1 // pred_check_branch
      %714 = sbr.rel (0) target = $region13
    $region12: #{tpu_custom_call.1} parent=1 // pred_region
      %s716 = ssub.s32 512, 512
      %717 = vsyncadd [#allocation3], %s716
      %s718 = sshll.u32 [#allocation2], 4
      %s719 = int_to_ptr.vmem [resolvable:$true] %s718
      %724 = dma.vmem_to_hbm [thread:$0]  %s719, 512, %s2, [#allocation3], 128, 128, 8
    $region13: #{tpu_custom_call.1} parent=1 // pred_fallthru
      _
    // Predicated region
    $region14: #{tpu_custom_call.1} parent=1 // pred_check
      _
    $region15: #{tpu_custom_call.1} parent=1 // pred_check_branch
      %726 = sbr.rel (0) target = $region17
    $region16: #{tpu_custom_call.1} parent=1 // pred_region
      %727 = dma.done [#allocation3], 512
    $region17: #{tpu_custom_call.1} parent=1 // pred_fallthru
      _
    %728 = vsyncpa [#allocation3], 1

</llo_original>
